<compile_context>
chip_gen: v7x
topology: tpu7x:2x2x1
jax: 0.10.0
libtpu: 0.0.40
codegen_flags: <defaults>
</compile_context>

<pallas_src>
import functools
import math

import jax
import jax.numpy as jnp
from jax.experimental import pallas as pl
from jax.experimental.pallas import tpu as pltpu


def _round_up(x, m):
    return ((x + m - 1) // m) * m


def _cdiv(a, b):
    return (a + b - 1) // b


def _vmem_capacity_bytes():
    """Physical VMEM per TensorCore; conservative fallback = v7x 64 MiB."""
    try:
        info = pltpu.get_tpu_info()
        for attr in ("vmem_capacity_bytes", "vmem_size_bytes", "vmem_bytes"):
            v = getattr(info, attr, None)
            if v:
                return int(v)
    except Exception:
        pass
    return 64 * 1024 * 1024


def _vmem_footprint(TB, TS, H, x_bytes, w_bytes, out_bytes, hid_bytes, need_acc):
    f = 2 * TB * H * x_bytes           # x tile (double-buffered)
    f += 2 * H * TS * w_bytes          # encoder tile
    f += 2 * TS * H * w_bytes          # decoder tile
    f += 2 * (TS + H) * 4              # bias tiles (f32)
    f += 2 * TB * H * out_bytes        # reconstruction output tile
    f += 2 * TB * TS * hid_bytes       # hidden output tile
    if need_acc:
        f += TB * H * 4                # f32 accumulator scratch
    return f


def sae_kernel(x_ref, enc_ref, dec_ref, b_enc_ref, b_dec_ref,
               recon_ref, hid_ref, *scratch, compute_dtype):
    # When no scratch is passed, accumulate directly in the resident recon
    # output block (its block index is constant along the s axis).
    acc_ref = scratch[0] if scratch else recon_ref

    s = pl.program_id(1)
    last = pl.num_programs(1) - 1

    x = x_ref[...]                       # (TB, H)  resident across s
    b_dec = b_dec_ref[...]               # (1, H)   resident across s
    x_bar = (x - b_dec).astype(compute_dtype)

    # Encoder matmul on the MXU (f32 accumulation), bias + ReLU on the VPU.
    pre = jnp.dot(x_bar, enc_ref[...].astype(compute_dtype),
                  preferred_element_type=jnp.float32) + b_enc_ref[...]
    hidden = jnp.maximum(pre, 0.0).astype(hid_ref.dtype)   # (TB, TS)
    hid_ref[...] = hidden

    # Decoder contraction over S; the decoder consumes the exact hidden value
    # that was stored, so recon and hidden are mutually consistent.
    partial = jnp.dot(hidden.astype(compute_dtype),
                      dec_ref[...].astype(compute_dtype),
                      preferred_element_type=jnp.float32)   # (TB, H) f32

    @pl.when(s == 0)
    def _():
        acc_ref[...] = partial.astype(acc_ref.dtype)        # no zero-init + add

    @pl.when(s > 0)
    def _():
        acc_ref[...] += partial.astype(acc_ref.dtype)

    @pl.when(s == last)
    def _():
        recon_ref[...] = (acc_ref[...].astype(jnp.float32) + b_dec
                          ).astype(recon_ref.dtype)


def sae_forward(x, encoder, decoder, bias_encoder, bias_decoder, *,
                tb=512, ts=512, bf16_matmul=True,
                hidden_dtype=None, out_dtype=None):
    """Pallas SAE forward. Returns (reconstruction, sae_hidden)."""
    B, H = x.shape
    Hd, S = encoder.shape
    assert Hd == H and decoder.shape == (S, H)
    assert bias_encoder.shape == (S,) and bias_decoder.shape == (H,)

    compute_dtype = jnp.bfloat16 if bf16_matmul else jnp.float32
    if hidden_dtype is None:
        hidden_dtype = jnp.bfloat16 if bf16_matmul else x.dtype
    if out_dtype is None:
        out_dtype = x.dtype

    # Cast weights once in HBM (halves enc/dec DMA bytes and removes the
    # per-step VPU cast inside the kernel).
    if bf16_matmul:
        encoder = encoder.astype(jnp.bfloat16)
        decoder = decoder.astype(jnp.bfloat16)

    x_bytes = jnp.dtype(x.dtype).itemsize
    w_bytes = jnp.dtype(encoder.dtype).itemsize
    out_bytes = jnp.dtype(out_dtype).itemsize
    hid_bytes = jnp.dtype(hidden_dtype).itemsize
    need_acc = jnp.dtype(out_dtype) != jnp.dtype(jnp.float32)

    # --- per-generation VMEM budget & tile derivation --------------------
    vmem_phys = _vmem_capacity_bytes()          # 128 MiB v5e/v6e, 64 MiB v7x
    vmem_limit = int(vmem_phys * 0.75)          # 96 MiB / 48 MiB
    tile_budget = int(vmem_limit * 0.85)        # headroom for compiler scratch

    TB = max(8, min(_round_up(tb, 8), _round_up(B, 8)))
    TS = max(128, min(_round_up(ts, 128), _round_up(S, 128)))

    def fits(tb_, ts_):
        return _vmem_footprint(tb_, ts_, H, x_bytes, w_bytes,
                               out_bytes, hid_bytes, need_acc) <= tile_budget

    # Shrink TS first (total weight HBM traffic depends on TB, not TS),
    # then TB, then TS down to the floor.
    while not fits(TB, TS) and TS > 256:
        TS = max(256, _round_up(TS // 2, 128))
    while not fits(TB, TS) and TB > 128:
        TB = max(128, _round_up(TB // 2, 8))
    while not fits(TB, TS) and TS > 128:
        TS = max(128, _round_up(TS // 2, 128))
    while not fits(TB, TS) and TB > 8:
        TB = max(8, _round_up(TB // 2, 8))

    # Megacore: if only one batch tile, halve TB once so both v7x TCs get work.
    if _cdiv(B, TB) == 1 and TB >= 256:
        half = _round_up(TB // 2, 8)
        if _cdiv(B, half) >= 2:
            TB = half

    Bp = _round_up(B, TB)
    Sp = _round_up(S, TS)
    grid_b = Bp // TB
    grid_s = Sp // TS

    # Zero-pad so the grid divides evenly.  Padded S columns give
    # relu(0 + 0) = 0 hidden units hitting zero decoder rows -> no effect on
    # the reconstruction; padded batch rows are sliced off below.
    xp = x if Bp == B else jnp.pad(x, ((0, Bp - B), (0, 0)))
    encp = encoder if Sp == S else jnp.pad(encoder, ((0, 0), (0, Sp - S)))
    decp = decoder if Sp == S else jnp.pad(decoder, ((0, Sp - S), (0, 0)))
    b_enc2 = (bias_encoder if Sp == S
              else jnp.pad(bias_encoder, (0, Sp - S))).reshape(1, Sp)
    b_dec2 = bias_decoder.reshape(1, H)

    # Cost estimate that accounts for weight re-streaming per batch tile.
    cost = pl.CostEstimate(
        flops=4 * B * H * S,
        transcendentals=0,
        bytes_accessed=int(x_bytes * Bp * H
                           + grid_b * w_bytes * 2 * Sp * H
                           + grid_b * 4 * (Sp + H)
                           + out_bytes * Bp * H
                           + hid_bytes * Bp * Sp))

    kernel = functools.partial(sae_kernel, compute_dtype=compute_dtype)
    scratch_shapes = [] if not need_acc else [pltpu.VMEM((TB, H), jnp.float32)]

    recon, hid = pl.pallas_call(
        kernel,
        out_shape=(jax.ShapeDtypeStruct((Bp, H), out_dtype),
                   jax.ShapeDtypeStruct((Bp, Sp), hidden_dtype)),
        grid=(grid_b, grid_s),
        in_specs=[
            pl.BlockSpec((TB, H), lambda i, s: (i, 0)),    # x: resident over s
            pl.BlockSpec((H, TS), lambda i, s: (0, s)),    # encoder column tile
            pl.BlockSpec((TS, H), lambda i, s: (s, 0)),    # decoder row tile
            pl.BlockSpec((1, TS), lambda i, s: (0, s)),    # encoder bias tile
            pl.BlockSpec((1, H), lambda i, s: (0, 0)),     # decoder bias: resident
        ],
        out_specs=(
            pl.BlockSpec((TB, H), lambda i, s: (i, 0)),    # recon: resident over s
            pl.BlockSpec((TB, TS), lambda i, s: (i, s)),   # sae_hidden tile
        ),
        scratch_shapes=scratch_shapes,
        compiler_params=pltpu.CompilerParams(
            dimension_semantics=("parallel", "arbitrary"),
            vmem_limit_bytes=vmem_limit,
        ),
        cost_estimate=cost,
    )(xp, encp, decp, b_enc2, b_dec2)

    return recon[:B], hid[:B, :S]


def kaiming_uniform(key, shape, dtype=jnp.float32):
    """Stand-in for nn.init.kaiming_uniform_ (a=0, fan_in = shape[1])."""
    fan_in = shape[1]
    bound = math.sqrt(6.0 / fan_in)
    return jax.random.uniform(key, shape, dtype, minval=-bound, maxval=bound)


def sae_reference(x, encoder, decoder, bias_encoder, bias_decoder):
    x_bar = x - bias_decoder
    sae_hidden = jnp.maximum(x_bar @ encoder + bias_encoder, 0.0)
    reconstruction = sae_hidden @ decoder + bias_decoder
    return reconstruction, sae_hidden


if __name__ == "__main__":
    # cfg: hidden_dim=128, sae_hidden_dim=256, batch=8 (TPU-friendly small shapes).
    batch, hidden_dim, sae_hidden_dim = 8, 128, 256

    key = jax.random.PRNGKey(0)
    kx, kenc, kdec = jax.random.split(key, 3)

    x = jax.random.normal(kx, (batch, hidden_dim), jnp.float32)
    encoder = kaiming_uniform(kenc, (hidden_dim, sae_hidden_dim))
    decoder = kaiming_uniform(kdec, (sae_hidden_dim, hidden_dim))
    bias_encoder = jnp.zeros((sae_hidden_dim,), jnp.float32)
    bias_decoder = jnp.zeros((hidden_dim,), jnp.float32)

    recon_ref, hid_ref = sae_reference(x, encoder, decoder,
                                       bias_encoder, bias_decoder)

    # 1) Production path: bf16 operands / bf16 hidden, f32 accumulation.
    recon_bf, hid_bf = sae_forward(x, encoder, decoder,
                                   bias_encoder, bias_decoder,
                                   bf16_matmul=True)
    jax.block_until_ready((recon_bf, hid_bf))
    assert recon_bf.shape == (batch, hidden_dim)
    assert hid_bf.shape == (batch, sae_hidden_dim)
    assert jnp.allclose(recon_bf.astype(jnp.float32), recon_ref,
                        atol=2e-1, rtol=1e-1)
    assert jnp.allclose(hid_bf.astype(jnp.float32), hid_ref,
                        atol=2e-1, rtol=1e-1)

    # 2) Exact path: f32 operands / f32 hidden, matches reference tightly.
    recon_f32, hid_f32 = sae_forward(x, encoder, decoder,
                                     bias_encoder, bias_decoder,
                                     bf16_matmul=False)
    jax.block_until_ready((recon_f32, hid_f32))
    assert jnp.allclose(recon_f32, recon_ref, atol=1e-5, rtol=1e-5)
    assert jnp.allclose(hid_f32, hid_ref, atol=1e-5, rtol=1e-5)

    # 3) Padding + multi-step grid on both axes (exercises tile derivation,
    #    megacore TB halving and the S-axis accumulation).
    batch2, hidden2, sae_hidden2 = 300, 128, 640
    kx2, kenc2, kdec2, kb = jax.random.split(jax.random.PRNGKey(1), 4)
    x2 = jax.random.normal(kx2, (batch2, hidden2), jnp.float32)
    enc2 = kaiming_uniform(kenc2, (hidden2, sae_hidden2))
    dec2 = kaiming_uniform(kdec2, (sae_hidden2, hidden2))
    be2 = 0.01 * jax.random.normal(kb, (sae_hidden2,), jnp.float32)
    bd2 = 0.01 * jnp.ones((hidden2,), jnp.float32)
    r2, h2 = sae_forward(x2, enc2, dec2, be2, bd2,
                         tb=512, ts=512, bf16_matmul=False)
    jax.block_until_ready((r2, h2))
    r2_ref, h2_ref = sae_reference(x2, enc2, dec2, be2, bd2)
    assert jnp.allclose(r2, r2_ref, atol=1e-4, rtol=1e-4)
    assert jnp.allclose(h2, h2_ref, atol=1e-4, rtol=1e-4)

    print("KERNEL_OK")
</pallas_src>

<mosaic_0001>
module attributes {stable_mosaic.version = 11 : i64} {
  func.func @sae_kernel(%arg0: i32, %arg1: i32, %arg2: memref<8x128xf32, #tpu.memory_space<vmem>>, %arg3: memref<128x256xbf16, #tpu.memory_space<vmem>>, %arg4: memref<256x128xbf16, #tpu.memory_space<vmem>>, %arg5: memref<1x256xf32, #tpu.memory_space<vmem>>, %arg6: memref<1x128xf32, #tpu.memory_space<vmem>>, %arg7: memref<8x128xf32, #tpu.memory_space<vmem>>, %arg8: memref<8x256xbf16, #tpu.memory_space<vmem>>) attributes {dimension_semantics = [#tpu.dimension_semantics<parallel>, #tpu.dimension_semantics<arbitrary>], iteration_bounds = array<i64: 1, 1>, scalar_prefetch = 0 : i64, scratch_operands = 0 : i64, tpu.core_type = #tpu.core_type<tc>, window_params = [{transform_indices = @transform_0, window_bounds = array<i64: 8, 128>}, {transform_indices = @transform_1, window_bounds = array<i64: 128, 256>}, {transform_indices = @transform_2, window_bounds = array<i64: 256, 128>}, {transform_indices = @transform_3, window_bounds = array<i64: 1, 256>}, {pipeline_mode = #tpu.pipeline_mode<synchronous>, transform_indices = @transform_4, window_bounds = array<i64: 1, 128>}, {transform_indices = @transform_5, window_bounds = array<i64: 8, 128>}, {transform_indices = @transform_6, window_bounds = array<i64: 8, 256>}]} {
    %c0 = arith.constant 0 : index
    %c0_0 = arith.constant 0 : index
    %0 = vector.load %arg2[%c0, %c0_0] : memref<8x128xf32, #tpu.memory_space<vmem>>, vector<8x128xf32>
    %c0_1 = arith.constant 0 : index
    %c0_2 = arith.constant 0 : index
    %1 = vector.load %arg6[%c0_1, %c0_2] : memref<1x128xf32, #tpu.memory_space<vmem>>, vector<1x128xf32>
    %2 = vector.broadcast %1 : vector<1x128xf32> to vector<8x128xf32>
    %3 = arith.subf %0, %2 : vector<8x128xf32>
    %4 = arith.truncf %3 : vector<8x128xf32> to vector<8x128xbf16>
    %c0_3 = arith.constant 0 : index
    %c0_4 = arith.constant 0 : index
    %5 = vector.load %arg3[%c0_3, %c0_4] : memref<128x256xbf16, #tpu.memory_space<vmem>>, vector<128x256xbf16>
    %cst = arith.constant dense<0.000000e+00> : vector<8x256xf32>
    %6 = tpu.matmul %4, %5, %cst {dimension_numbers = #tpu.dot_dimension_numbers<[1], [0], [0], [1], [0, 0, 1, 1], [], []>} : vector<8x128xbf16>, vector<128x256xbf16>, vector<8x256xf32> -> vector<8x256xf32>
    %c0_5 = arith.constant 0 : index
    %c0_6 = arith.constant 0 : index
    %7 = vector.load %arg5[%c0_5, %c0_6] : memref<1x256xf32, #tpu.memory_space<vmem>>, vector<1x256xf32>
    %8 = vector.broadcast %7 : vector<1x256xf32> to vector<8x256xf32>
    %9 = arith.addf %6, %8 : vector<8x256xf32>
    %cst_7 = arith.constant 0.000000e+00 : f32
    %10 = vector.broadcast %cst_7 : f32 to vector<8x256xf32>
    %11 = arith.maximumf %9, %10 : vector<8x256xf32>
    %12 = arith.truncf %11 : vector<8x256xf32> to vector<8x256xbf16>
    %c0_8 = arith.constant 0 : index
    %c0_9 = arith.constant 0 : index
    %13 = vector.load %arg8[%c0_8, %c0_9] : memref<8x256xbf16, #tpu.memory_space<vmem>>, vector<8x256xbf16>
    tpu.vector_store %arg8[%c0_8, %c0_9], %12 {strides = array<i32>} : memref<8x256xbf16, #tpu.memory_space<vmem>>, vector<8x256xbf16>,
    %c0_10 = arith.constant 0 : index
    %c0_11 = arith.constant 0 : index
    %14 = vector.load %arg4[%c0_10, %c0_11] : memref<256x128xbf16, #tpu.memory_space<vmem>>, vector<256x128xbf16>
    %cst_12 = arith.constant dense<0.000000e+00> : vector<8x128xf32>
    %15 = tpu.matmul %12, %14, %cst_12 {dimension_numbers = #tpu.dot_dimension_numbers<[1], [0], [0], [1], [0, 0, 1, 1], [], []>} : vector<8x256xbf16>, vector<256x128xbf16>, vector<8x128xf32> -> vector<8x128xf32>
    %c0_i32 = arith.constant 0 : i32
    %16 = arith.cmpi eq, %arg1, %c0_i32 : i32
    %17 = arith.extui %16 : i1 to i32
    %c0_i32_13 = arith.constant 0 : i32
    %18 = arith.cmpi ne, %17, %c0_i32_13 : i32
    scf.if %18 {
      %c0_18 = arith.constant 0 : index
      %c0_19 = arith.constant 0 : index
      %25 = vector.load %arg7[%c0_18, %c0_19] : memref<8x128xf32, #tpu.memory_space<vmem>>, vector<8x128xf32>
      tpu.vector_store %arg7[%c0_18, %c0_19], %15 {strides = array<i32>} : memref<8x128xf32, #tpu.memory_space<vmem>>, vector<8x128xf32>,
    } else {
    }
    %c0_i32_14 = arith.constant 0 : i32
    %19 = arith.cmpi sgt, %arg1, %c0_i32_14 : i32
    %20 = arith.extui %19 : i1 to i32
    %c0_i32_15 = arith.constant 0 : i32
    %21 = arith.cmpi ne, %20, %c0_i32_15 : i32
    scf.if %21 {
      %c0_18 = arith.constant 0 : index
      %c0_19 = arith.constant 0 : index
      %25 = vector.load %arg7[%c0_18, %c0_19] : memref<8x128xf32, #tpu.memory_space<vmem>>, vector<8x128xf32>
      %26 = arith.addf %25, %15 : vector<8x128xf32>
      %c0_20 = arith.constant 0 : index
      %c0_21 = arith.constant 0 : index
      %27 = vector.load %arg7[%c0_20, %c0_21] : memref<8x128xf32, #tpu.memory_space<vmem>>, vector<8x128xf32>
      tpu.vector_store %arg7[%c0_20, %c0_21], %26 {strides = array<i32>} : memref<8x128xf32, #tpu.memory_space<vmem>>, vector<8x128xf32>,
    } else {
    }
    %c0_i32_16 = arith.constant 0 : i32
    %22 = arith.cmpi eq, %arg1, %c0_i32_16 : i32
    %23 = arith.extui %22 : i1 to i32
    %c0_i32_17 = arith.constant 0 : i32
    %24 = arith.cmpi ne, %23, %c0_i32_17 : i32
    scf.if %24 {
      %c0_18 = arith.constant 0 : index
      %c0_19 = arith.constant 0 : index
      %25 = vector.load %arg7[%c0_18, %c0_19] : memref<8x128xf32, #tpu.memory_space<vmem>>, vector<8x128xf32>
      %26 = vector.broadcast %1 : vector<1x128xf32> to vector<8x128xf32>
      %27 = arith.addf %25, %26 : vector<8x128xf32>
      %c0_20 = arith.constant 0 : index
      %c0_21 = arith.constant 0 : index
      %28 = vector.load %arg7[%c0_20, %c0_21] : memref<8x128xf32, #tpu.memory_space<vmem>>, vector<8x128xf32>
      tpu.vector_store %arg7[%c0_20, %c0_21], %27 {strides = array<i32>} : memref<8x128xf32, #tpu.memory_space<vmem>>, vector<8x128xf32>,
    } else {
    }
    return
  }
  func.func @transform_0(%arg0: i32, %arg1: i32) -> (i32, i32) {
    %c0_i32 = arith.constant 0 : i32
    %c0_i32_0 = arith.constant 0 : i32
    return %arg0, %c0_i32 : i32, i32
  }
  func.func @transform_1(%arg0: i32, %arg1: i32) -> (i32, i32) {
    %c0_i32 = arith.constant 0 : i32
    %c0_i32_0 = arith.constant 0 : i32
    return %c0_i32, %arg1 : i32, i32
  }
  func.func @transform_2(%arg0: i32, %arg1: i32) -> (i32, i32) {
    %c0_i32 = arith.constant 0 : i32
    %c0_i32_0 = arith.constant 0 : i32
    return %arg1, %c0_i32 : i32, i32
  }
  func.func @transform_3(%arg0: i32, %arg1: i32) -> (i32, i32) {
    %c0_i32 = arith.constant 0 : i32
    %c0_i32_0 = arith.constant 0 : i32
    return %c0_i32, %arg1 : i32, i32
  }
  func.func @transform_4(%arg0: i32, %arg1: i32) -> (i32, i32) {
    %c0_i32 = arith.constant 0 : i32
    %c0_i32_0 = arith.constant 0 : i32
    %c0_i32_1 = arith.constant 0 : i32
    return %c0_i32, %c0_i32_0 : i32, i32
  }
  func.func @transform_5(%arg0: i32, %arg1: i32) -> (i32, i32) {
    %c0_i32 = arith.constant 0 : i32
    %c0_i32_0 = arith.constant 0 : i32
    return %arg0, %c0_i32 : i32, i32
  }
  func.func @transform_6(%arg0: i32, %arg1: i32) -> (i32, i32) {
    %c0_i32 = arith.constant 0 : i32
    return %arg0, %arg1 : i32, i32
  }
}

</mosaic_0001>

<llo_original>
// kernel: tpu_custom_call.1
$region0: #{tpu_custom_call.1}
  #allocation0 [shape = 'u32[]', space=smem, size = 0x4, offset = 0x4, fixed_abs, tag = 'smem constant byte address 0x4 - core index']
  #allocation1 [shape = 'u32[144,128]{1,0:T(1,128)}', space=vmem, size = 0x12000, scoped, tag = 'internal scratch']
  %s0 = inlined_call_operand.hbm [shape: f32[8,128], index: 0, kind: input, shape index: {}]
  %s1 = inlined_call_operand.hbm [shape: bf16[128,256], index: 1, kind: input, shape index: {}]
  %s2 = inlined_call_operand.hbm [shape: bf16[256,128], index: 2, kind: input, shape index: {}]
  %s3 = inlined_call_operand.vmem [shape: f32[1,256], index: 3, kind: input, shape index: {}]
  %s4 = inlined_call_operand.vmem [shape: f32[1,128], index: 4, kind: input, shape index: {}]
  %s5 = inlined_call_operand.hbm [shape: f32[8,128], index: 5, kind: output, shape index: {0}]
  %s6 = inlined_call_operand.hbm [shape: bf16[8,256], index: 6, kind: output, shape index: {1}]
  %7 = xla_tuple %s5, %s6
  %s8 = sld [smem:[#allocation0]]
  $region62: #{tpu_custom_call.1} parent=0
    _
  %s10 = ssub.s32 1, %s8
  %s11 = scalar_select 0, %s10, %s8
  $region1: #{tpu_custom_call.1} parent=0
    #allocation2 [shape = 'u8[4096]{0}', space=vmem, size = 0x1000, scoped, tag = 'input window, operand 0, single buffered']
    #allocation3 [shape = 's32[1]{0}', space=sflag, size = 0x4, scoped, tag = 'scoped memory for tpu_custom_call.1']
    #allocation4 [shape = 's32[1]{0}', space=sflag, size = 0x4, scoped, tag = 'scoped memory for tpu_custom_call.1']
    #allocation5 [shape = 'u8[65536]{0}', space=vmem, size = 0x10000, scoped, tag = 'input window, operand 1, single buffered']
    #allocation6 [shape = 's32[1]{0}', space=sflag, size = 0x4, scoped, tag = 'scoped memory for tpu_custom_call.1']
    #allocation7 [shape = 'u8[65536]{0}', space=vmem, size = 0x10000, scoped, tag = 'input window, operand 2, single buffered']
    #allocation8 [shape = 'u8[4096]{0}', space=vmem, size = 0x1000, scoped, tag = 'output window, operand 0, single buffered']
    #allocation9 [shape = 'u8[4096]{0}', space=vmem, size = 0x1000, scoped, tag = 'output window, operand 1, single buffered']
    #allocation10 [shape = 's32[1]{0}', space=sflag, size = 0x4, scoped, tag = 'scoped memory for tpu_custom_call.1']
    %12 = vsyncpa [#allocation3], 0
    %13 = vsyncpa [#allocation6], 0
    %14 = vsyncpa [#allocation4], 0
    %15 = vsyncpa [#allocation10], 0
    // Predicated region
    $region2: #{tpu_custom_call.1} parent=1 // pred_check
      _
    $region3: #{tpu_custom_call.1} parent=1 // pred_check_branch
      %17 = sbr.rel (0) target = $region5
    $region4: #{tpu_custom_call.1} parent=1 // pred_region
      %s19 = ssub.s32 128, 128
      %20 = vsyncadd [#allocation3], %s19
      %s22 = sshll.u32 [#allocation2], 4
      %s23 = int_to_ptr.vmem [resolvable:$true] %s22
      %25 = dma.hbm_to_vmem [thread:$0]  %s0, 128, %s23, [#allocation3]
    $region5: #{tpu_custom_call.1} parent=1 // pred_fallthru
      _
    // Predicated region
    $region6: #{tpu_custom_call.1} parent=1 // pred_check
      _
    $region7: #{tpu_custom_call.1} parent=1 // pred_check_branch
      %27 = sbr.rel (0) target = $region9
    $region8: #{tpu_custom_call.1} parent=1 // pred_region
      %s29 = ssub.s32 2048, 2048
      %30 = vsyncadd [#allocation6], %s29
      %s31 = sshll.u32 [#allocation5], 4
      %s32 = int_to_ptr.vmem [resolvable:$true] %s31
      %37 = dma.hbm_to_vmem [thread:$0]  %s1, 2048, %s32, [#allocation6], 128, 128, 8
    $region9: #{tpu_custom_call.1} parent=1 // pred_fallthru
      _
    // Predicated region
    $region10: #{tpu_custom_call.1} parent=1 // pred_check
      _
    $region11: #{tpu_custom_call.1} parent=1 // pred_check_branch
      %39 = sbr.rel (0) target = $region13
    $region12: #{tpu_custom_call.1} parent=1 // pred_region
      %s41 = ssub.s32 2048, 2048
      %42 = vsyncadd [#allocation6], %s41
      %s43 = sshll.u32 [#allocation7], 4
      %s44 = int_to_ptr.vmem [resolvable:$true] %s43
      %49 = dma.hbm_to_vmem [thread:$0]  %s2, 2048, %s44, [#allocation6], 64, 64, 4
    $region13: #{tpu_custom_call.1} parent=1 // pred_fallthru
      _
    // Predicated region
    $region14: #{tpu_custom_call.1} parent=1 // pred_check
      _
    $region15: #{tpu_custom_call.1} parent=1 // pred_check_branch
      %51 = sbr.rel (0) target = $region17
    $region16: #{tpu_custom_call.1} parent=1 // pred_region
      _
    $region17: #{tpu_custom_call.1} parent=1 // pred_fallthru
      _
    // Predicated region
    $region18: #{tpu_custom_call.1} parent=1 // pred_check
      _
    $region19: #{tpu_custom_call.1} parent=1 // pred_check_branch
      %53 = sbr.rel (0) target = $region21
    $region20: #{tpu_custom_call.1} parent=1 // pred_region
      _
    $region21: #{tpu_custom_call.1} parent=1 // pred_fallthru
      _
    // Predicated region
    $region22: #{tpu_custom_call.1} parent=1 // pred_check
      _
    $region23: #{tpu_custom_call.1} parent=1 // pred_check_branch
      %55 = sbr.rel (0) target = $region25
    $region24: #{tpu_custom_call.1} parent=1 // pred_region
      %56 = dma.done [#allocation3], 128
    $region25: #{tpu_custom_call.1} parent=1 // pred_fallthru
      _
    // Predicated region
    $region26: #{tpu_custom_call.1} parent=1 // pred_check
      _
    $region27: #{tpu_custom_call.1} parent=1 // pred_check_branch
      %58 = sbr.rel (0) target = $region29
    $region28: #{tpu_custom_call.1} parent=1 // pred_region
      %59 = dma.done [#allocation6], 2048
    $region29: #{tpu_custom_call.1} parent=1 // pred_fallthru
      _
    // Predicated region
    $region30: #{tpu_custom_call.1} parent=1 // pred_check
      _
    $region31: #{tpu_custom_call.1} parent=1 // pred_check_branch
      %61 = sbr.rel (0) target = $region33
    $region32: #{tpu_custom_call.1} parent=1 // pred_region
      %62 = dma.done [#allocation6], 2048
    $region33: #{tpu_custom_call.1} parent=1 // pred_fallthru
      _
    %v64 = vld [vmem:[#allocation2] sm:$0xff]
    %v65 = vld [vmem:[%s4] sm:$0x1]
    %v67 = vlaneseq
    %v68 = vshrl.u32 %v67, 7
    %v69 = vsub.s32 0, %v68
    %v70 = vrot.slane %v65, %v69
    %v72 = vsub.f32 %v64, %v70
    %v73 = vpack.c.bf16 %v72, %v72
    %v74 = vld [vmem:[#allocation5] sm:$0xff]
    %v75 = vld [vmem:[#allocation5 + $0x8] sm:$0xff]
    %v76 = vld [vmem:[#allocation5 + $0x10] sm:$0xff]
    %v77 = vld [vmem:[#allocation5 + $0x18] sm:$0xff]
    %v78 = vld [vmem:[#allocation5 + $0x20] sm:$0xff]
    %v79 = vld [vmem:[#allocation5 + $0x28] sm:$0xff]
    %v80 = vld [vmem:[#allocation5 + $0x30] sm:$0xff]
    %v81 = vld [vmem:[#allocation5 + $0x38] sm:$0xff]
    %v82 = vld [vmem:[#allocation5 + $0x40] sm:$0xff]
    %v83 = vld [vmem:[#allocation5 + $0x48] sm:$0xff]
    %v84 = vld [vmem:[#allocation5 + $0x50] sm:$0xff]
    %v85 = vld [vmem:[#allocation5 + $0x58] sm:$0xff]
    %v86 = vld [vmem:[#allocation5 + $0x60] sm:$0xff]
    %v87 = vld [vmem:[#allocation5 + $0x68] sm:$0xff]
    %v88 = vld [vmem:[#allocation5 + $0x70] sm:$0xff]
    %v89 = vld [vmem:[#allocation5 + $0x78] sm:$0xff]
    %v90 = vld [vmem:[%s3] sm:$0x3]
    %v92 = vlaneseq
    %v93 = vshrl.u32 %v92, 7
    %v94 = vsub.s32 0, %v93
    %v95 = vrot.slane %v90, %v94
    %v96 = vlaneseq
    %v97 = vshrl.u32 %v96, 7
    %v98 = vsub.s32 1, %v97
    %v99 = vrot.slane %v90, %v98
    %v118 = vunpack.c.l.b16 %v74
    %v119 = vunpack.c.h.b16 %v74
    %v120 = vunpack.c.l.b16 %v75
    %v121 = vunpack.c.h.b16 %v75
    %v122 = vunpack.c.l.b16 %v76
    %v123 = vunpack.c.h.b16 %v76
    %v124 = vunpack.c.l.b16 %v77
    %v125 = vunpack.c.h.b16 %v77
    %v126 = vunpack.c.l.b16 %v78
    %v127 = vunpack.c.h.b16 %v78
    %v128 = vunpack.c.l.b16 %v79
    %v129 = vunpack.c.h.b16 %v79
    %v130 = vunpack.c.l.b16 %v80
    %v131 = vunpack.c.h.b16 %v80
    %v132 = vunpack.c.l.b16 %v81
    %v133 = vunpack.c.h.b16 %v81
    %v134 = vunpack.c.l.b16 %v82
    %v135 = vunpack.c.h.b16 %v82
    %v136 = vunpack.c.l.b16 %v83
    %v137 = vunpack.c.h.b16 %v83
    %v138 = vunpack.c.l.b16 %v84
    %v139 = vunpack.c.h.b16 %v84
    %v140 = vunpack.c.l.b16 %v85
    %v141 = vunpack.c.h.b16 %v85
    %v142 = vunpack.c.l.b16 %v86
    %v143 = vunpack.c.h.b16 %v86
    %v144 = vunpack.c.l.b16 %v87
    %v145 = vunpack.c.h.b16 %v87
    %v146 = vunpack.c.l.b16 %v88
    %v147 = vunpack.c.h.b16 %v88
    %v148 = vunpack.c.l.b16 %v89
    %v149 = vunpack.c.h.b16 %v89
    %v150 = vpack.c.b16 %v120, %v118
    %v151 = vpack.c.b16 %v121, %v119
    %v152 = vpack.c.b16 %v124, %v122
    %v153 = vpack.c.b16 %v125, %v123
    %v154 = vpack.c.b16 %v128, %v126
    %v155 = vpack.c.b16 %v129, %v127
    %v156 = vpack.c.b16 %v132, %v130
    %v157 = vpack.c.b16 %v133, %v131
    %v158 = vpack.c.b16 %v136, %v134
    %v159 = vpack.c.b16 %v137, %v135
    %v160 = vpack.c.b16 %v140, %v138
    %v161 = vpack.c.b16 %v141, %v139
    %v162 = vpack.c.b16 %v144, %v142
    %v163 = vpack.c.b16 %v145, %v143
    %v164 = vpack.c.b16 %v148, %v146
    %v165 = vpack.c.b16 %v149, %v147
    %182 = vmatprep.subr.bf16.mxu0 %v151
    %183 = vmatpush1.bf16.msra.mxu0 %v150
    %184 = vmatprep.subr.bf16.mxu0 %v153
    %185 = vmatpush1.bf16.msra.mxu0 %v152
    %186 = vmatprep.subr.bf16.mxu0 %v155
    %187 = vmatpush1.bf16.msra.mxu0 %v154
    %188 = vmatprep.subr.bf16.mxu0 %v157
    %189 = vmatpush1.bf16.msra.mxu0 %v156
    %190 = vmatprep.subr.bf16.mxu0 %v159
    %191 = vmatpush1.bf16.msra.mxu0 %v158
    %192 = vmatprep.subr.bf16.mxu0 %v161
    %193 = vmatpush1.bf16.msra.mxu0 %v160
    %194 = vmatprep.subr.bf16.mxu0 %v163
    %195 = vmatpush1.bf16.msra.mxu0 %v162
    %196 = vmatprep.subr.bf16.mxu0 %v165
    %197 = vmatpush1.bf16.msra.mxu0 %v164
    %198 = vmatprep.subr.bf16.mxu0 0
    %199 = vmatpush1.bf16.msra.mxu0 0
    %200 = vmatprep.subr.bf16.mxu0 0
    %201 = vmatpush1.bf16.msra.mxu0 0
    %202 = vmatprep.subr.bf16.mxu0 0
    %203 = vmatpush1.bf16.msra.mxu0 0
    %204 = vmatprep.subr.bf16.mxu0 0
    %205 = vmatpush1.bf16.msra.mxu0 0
    %206 = vmatprep.subr.bf16.mxu0 0
    %207 = vmatpush1.bf16.msra.mxu0 0
    %208 = vmatprep.subr.bf16.mxu0 0
    %209 = vmatpush1.bf16.msra.mxu0 0
    %210 = vmatprep.subr.bf16.mxu0 0
    %211 = vmatpush1.bf16.msra.mxu0 0
    %212 = vmatprep.subr.bf16.mxu0 0
    %213 = vmatpush1.bf16.msra.mxu0 0
    %214 = vmatprep.mubr.bf16.mxu0 0
    %215 = vmatmul.mubr.bf16.gmra.mrb[0].mxu0 %v73
    %v216 = vpop.f32.mrb[0].mxu0
    %v217 = vadd.f32 %v95, %v216
    %v218 = vpop.f32.mrb[0].mxu0
    %v219 = vadd.f32 %v99, %v218
    %v220 = vpop.f32.mrb[0].mxu0
    %v221 = vpop.f32.mrb[0].mxu0
    %222 = vdwg.mxu0
    %v223 = vmax.f32 %v217, 0.0
    %v224 = vmax.f32 %v219, 0.0
    %v225 = vpack.c.bf16 %v223, %v223
    %v226 = vpack.c.bf16 %v224, %v224
    %v229 = vunpack.c.l.b16 %v225
    %v230 = vunpack.c.l.b16 %v226
    %v231 = vpack.c.b16 %v230, %v229
    %233 = vst [vmem:[#allocation9] sm:$0xff] %v231
    %v234 = vld [vmem:[#allocation7] sm:$0xf]
    %v235 = vld [vmem:[#allocation7 + $0x4] sm:$0xf]
    %v236 = vld [vmem:[#allocation7 + $0x8] sm:$0xf]
    %v237 = vld [vmem:[#allocation7 + $0xc] sm:$0xf]
    %v238 = vld [vmem:[#allocation7 + $0x10] sm:$0xf]
    %v239 = vld [vmem:[#allocation7 + $0x14] sm:$0xf]
    %v240 = vld [vmem:[#allocation7 + $0x18] sm:$0xf]
    %v241 = vld [vmem:[#allocation7 + $0x1c] sm:$0xf]
    %v242 = vld [vmem:[#allocation7 + $0x20] sm:$0xf]
    %v243 = vld [vmem:[#allocation7 + $0x24] sm:$0xf]
    %v244 = vld [vmem:[#allocation7 + $0x28] sm:$0xf]
    %v245 = vld [vmem:[#allocation7 + $0x2c] sm:$0xf]
    %v246 = vld [vmem:[#allocation7 + $0x30] sm:$0xf]
    %v247 = vld [vmem:[#allocation7 + $0x34] sm:$0xf]
    %v248 = vld [vmem:[#allocation7 + $0x38] sm:$0xf]
    %v249 = vld [vmem:[#allocation7 + $0x3c] sm:$0xf]
    %v250 = vld [vmem:[#allocation7 + $0x40] sm:$0xf]
    %v251 = vld [vmem:[#allocation7 + $0x44] sm:$0xf]
    %v252 = vld [vmem:[#allocation7 + $0x48] sm:$0xf]
    %v253 = vld [vmem:[#allocation7 + $0x4c] sm:$0xf]
    %v254 = vld [vmem:[#allocation7 + $0x50] sm:$0xf]
    %v255 = vld [vmem:[#allocation7 + $0x54] sm:$0xf]
    %v256 = vld [vmem:[#allocation7 + $0x58] sm:$0xf]
    %v257 = vld [vmem:[#allocation7 + $0x5c] sm:$0xf]
    %v258 = vld [vmem:[#allocation7 + $0x60] sm:$0xf]
    %v259 = vld [vmem:[#allocation7 + $0x64] sm:$0xf]
    %v260 = vld [vmem:[#allocation7 + $0x68] sm:$0xf]
    %v261 = vld [vmem:[#allocation7 + $0x6c] sm:$0xf]
    %v262 = vld [vmem:[#allocation7 + $0x70] sm:$0xf]
    %v263 = vld [vmem:[#allocation7 + $0x74] sm:$0xf]
    %v264 = vld [vmem:[#allocation7 + $0x78] sm:$0xf]
    %v265 = vld [vmem:[#allocation7 + $0x7c] sm:$0xf]
    %v298 = vunpack.c.l.b16 %v234
    %v299 = vunpack.c.l.b16 %v235
    %v300 = vunpack.c.l.b16 %v236
    %v301 = vunpack.c.l.b16 %v237
    %v302 = vunpack.c.l.b16 %v238
    %v303 = vunpack.c.l.b16 %v239
    %v304 = vunpack.c.l.b16 %v240
    %v305 = vunpack.c.l.b16 %v241
    %v306 = vunpack.c.l.b16 %v242
    %v307 = vunpack.c.l.b16 %v243
    %v308 = vunpack.c.l.b16 %v244
    %v309 = vunpack.c.l.b16 %v245
    %v310 = vunpack.c.l.b16 %v246
    %v311 = vunpack.c.l.b16 %v247
    %v312 = vunpack.c.l.b16 %v248
    %v313 = vunpack.c.l.b16 %v249
    %v314 = vunpack.c.l.b16 %v250
    %v315 = vunpack.c.l.b16 %v251
    %v316 = vunpack.c.l.b16 %v252
    %v317 = vunpack.c.l.b16 %v253
    %v318 = vunpack.c.l.b16 %v254
    %v319 = vunpack.c.l.b16 %v255
    %v320 = vunpack.c.l.b16 %v256
    %v321 = vunpack.c.l.b16 %v257
    %v322 = vunpack.c.l.b16 %v258
    %v323 = vunpack.c.l.b16 %v259
    %v324 = vunpack.c.l.b16 %v260
    %v325 = vunpack.c.l.b16 %v261
    %v326 = vunpack.c.l.b16 %v262
    %v327 = vunpack.c.l.b16 %v263
    %v328 = vunpack.c.l.b16 %v264
    %v329 = vunpack.c.l.b16 %v265
    %v330 = vpack.c.b16 %v299, %v298
    %v331 = vpack.c.b16 %v301, %v300
    %v332 = vpack.c.b16 %v303, %v302
    %v333 = vpack.c.b16 %v305, %v304
    %v334 = vpack.c.b16 %v307, %v306
    %v335 = vpack.c.b16 %v309, %v308
    %v336 = vpack.c.b16 %v311, %v310
    %v337 = vpack.c.b16 %v313, %v312
    %v338 = vpack.c.b16 %v315, %v314
    %v339 = vpack.c.b16 %v317, %v316
    %v340 = vpack.c.b16 %v319, %v318
    %v341 = vpack.c.b16 %v321, %v320
    %v342 = vpack.c.b16 %v323, %v322
    %v343 = vpack.c.b16 %v325, %v324
    %v344 = vpack.c.b16 %v327, %v326
    %v345 = vpack.c.b16 %v329, %v328
    %362 = vmatprep.subr.bf16.mxu0 0
    %363 = vmatpush1.bf16.msra.mxu0 %v330
    %364 = vmatprep.subr.bf16.mxu0 0
    %365 = vmatpush1.bf16.msra.mxu0 %v331
    %366 = vmatprep.subr.bf16.mxu0 0
    %367 = vmatpush1.bf16.msra.mxu0 %v332
    %368 = vmatprep.subr.bf16.mxu0 0
    %369 = vmatpush1.bf16.msra.mxu0 %v333
    %370 = vmatprep.subr.bf16.mxu0 0
    %371 = vmatpush1.bf16.msra.mxu0 %v334
    %372 = vmatprep.subr.bf16.mxu0 0
    %373 = vmatpush1.bf16.msra.mxu0 %v335
    %374 = vmatprep.subr.bf16.mxu0 0
    %375 = vmatpush1.bf16.msra.mxu0 %v336
    %376 = vmatprep.subr.bf16.mxu0 0
    %377 = vmatpush1.bf16.msra.mxu0 %v337
    %378 = vmatprep.subr.bf16.mxu0 0
    %379 = vmatpush1.bf16.msra.mxu0 %v338
    %380 = vmatprep.subr.bf16.mxu0 0
    %381 = vmatpush1.bf16.msra.mxu0 %v339
    %382 = vmatprep.subr.bf16.mxu0 0
    %383 = vmatpush1.bf16.msra.mxu0 %v340
    %384 = vmatprep.subr.bf16.mxu0 0
    %385 = vmatpush1.bf16.msra.mxu0 %v341
    %386 = vmatprep.subr.bf16.mxu0 0
    %387 = vmatpush1.bf16.msra.mxu0 %v342
    %388 = vmatprep.subr.bf16.mxu0 0
    %389 = vmatpush1.bf16.msra.mxu0 %v343
    %390 = vmatprep.subr.bf16.mxu0 0
    %391 = vmatpush1.bf16.msra.mxu0 %v344
    %392 = vmatprep.subr.bf16.mxu0 0
    %393 = vmatpush1.bf16.msra.mxu0 %v345
    %394 = vmatprep.mubr.bf16.mxu0 %v226
    %395 = vmatmul.mubr.bf16.gmra.mrb[0].mxu0 %v225
    %v396 = vpop.f32.mrb[0].mxu0
    %v397 = vadd.f32 0.0, %v396
    %v398 = vpop.f32.mrb[0].mxu0
    %v399 = vpop.f32.mrb[0].mxu0
    %v400 = vpop.f32.mrb[0].mxu0
    %401 = vdwg.mxu0
    %p402 = scmp.eq.s32.totalorder 0, 0
    // Predicated region
    $region34: #{tpu_custom_call.1} parent=1 // pred_check
      %p403 = pneg %p402
    $region35: #{tpu_custom_call.1} parent=1 // pred_check_branch
      %405 = sbr.rel (%p403) target = $region37
    $region36: #{tpu_custom_call.1} parent=1 // pred_region
      %406 = vst [vmem:[#allocation8] sm:$0xff] %v397
    $region37: #{tpu_custom_call.1} parent=1 // pred_fallthru
      _
    %p407 = scmp.gt.s32.totalorder 0, 0
    // Predicated region
    $region38: #{tpu_custom_call.1} parent=1 // pred_check
      %p408 = pneg %p407
    $region39: #{tpu_custom_call.1} parent=1 // pred_check_branch
      %410 = sbr.rel (%p408) target = $region41
    $region40: #{tpu_custom_call.1} parent=1 // pred_region
      %v411 = vld [vmem:[#allocation8] sm:$0xff]
      %v412 = vadd.f32 %v411, %v397
      %413 = vst [vmem:[#allocation8] sm:$0xff] %v412
    $region41: #{tpu_custom_call.1} parent=1 // pred_fallthru
      _
    // Predicated region
    $region42: #{tpu_custom_call.1} parent=1 // pred_check
      %p414 = pneg %p402
    $region43: #{tpu_custom_call.1} parent=1 // pred_check_branch
      %416 = sbr.rel (%p414) target = $region45
    $region44: #{tpu_custom_call.1} parent=1 // pred_region
      %v417 = vld [vmem:[#allocation8] sm:$0xff]
      %v418 = vadd.f32 %v417, %v70
      %419 = vst [vmem:[#allocation8] sm:$0xff] %v418
    $region45: #{tpu_custom_call.1} parent=1 // pred_fallthru
      _
    // Predicated region
    $region46: #{tpu_custom_call.1} parent=1 // pred_check
      _
    $region47: #{tpu_custom_call.1} parent=1 // pred_check_branch
      %421 = sbr.rel (0) target = $region49
    $region48: #{tpu_custom_call.1} parent=1 // pred_region
      %s423 = ssub.s32 128, 128
      %424 = vsyncadd [#allocation4], %s423
      %s426 = sshll.u32 [#allocation8], 4
      %s427 = int_to_ptr.vmem [resolvable:$true] %s426
      %429 = dma.vmem_to_hbm [thread:$0]  %s427, 128, %s5, [#allocation4]
    $region49: #{tpu_custom_call.1} parent=1 // pred_fallthru
      _
    // Predicated region
    $region50: #{tpu_custom_call.1} parent=1 // pred_check
      _
    $region51: #{tpu_custom_call.1} parent=1 // pred_check_branch
      %431 = sbr.rel (0) target = $region53
    $region52: #{tpu_custom_call.1} parent=1 // pred_region
      %s433 = ssub.s32 128, 128
      %434 = vsyncadd [#allocation10], %s433
      %s436 = sshll.u32 [#allocation9], 4
      %s437 = int_to_ptr.vmem [resolvable:$true] %s436
      %439 = dma.vmem_to_hbm [thread:$0]  %s437, 128, %s6, [#allocation10]
    $region53: #{tpu_custom_call.1} parent=1 // pred_fallthru
      _
    // Predicated region
    $region54: #{tpu_custom_call.1} parent=1 // pred_check
      _
    $region55: #{tpu_custom_call.1} parent=1 // pred_check_branch
      %441 = sbr.rel (0) target = $region57
    $region56: #{tpu_custom_call.1} parent=1 // pred_region
      %442 = dma.done [#allocation4], 128
    $region57: #{tpu_custom_call.1} parent=1 // pred_fallthru
      _
    // Predicated region
    $region58: #{tpu_custom_call.1} parent=1 // pred_check
      _
    $region59: #{tpu_custom_call.1} parent=1 // pred_check_branch
      %444 = sbr.rel (0) target = $region61
    $region60: #{tpu_custom_call.1} parent=1 // pred_region
      %445 = dma.done [#allocation10], 128
    $region61: #{tpu_custom_call.1} parent=1 // pred_fallthru
      _
    %446 = vsyncpa [#allocation3], 1
    %447 = vsyncpa [#allocation6], 1
    %448 = vsyncpa [#allocation4], 1
    %449 = vsyncpa [#allocation10], 1

</llo_original>
